<compile_context>
chip_gen: v5e
topology: v5e:2x2
jax: 0.10.0
libtpu: 0.0.40
codegen_flags: <defaults>
</compile_context>

<pallas_src>
import jax
import jax.numpy as jnp
from jax.experimental import pallas as pl
from jax.experimental.pallas import tpu as pltpu


def _round_up(a: int, b: int) -> int:
    return -(-a // b) * b


def _round_down(a: int, b: int) -> int:
    return (a // b) * b


def _vmem_config():
    """Return (tile working-set budget, vmem_limit_bytes), generation-aware."""
    cap = None
    try:
        cap = getattr(pltpu.get_tpu_info(), "vmem_capacity_bytes", None)
    except Exception:
        cap = None
    if cap is None:
        try:
            kind = jax.devices()[0].device_kind.lower()
            cap = (64 << 20) if "v7" in kind else (128 << 20)
        except Exception:
            cap = 64 << 20  # conservative default (v7x-sized)
    if cap <= (64 << 20):          # v7x-class: 64 MiB physical VMEM per core
        return 26 << 20, 48 << 20
    return 48 << 20, 100 << 20     # v5e / v6e: 128 MiB physical VMEM


def _linear_fused_kernel(x_ref, w_ref, b_ref, o_ref):
    """Full-K path: one MXU dot per output tile, bias fused, no scratch."""
    o_ref[...] = (
        jnp.dot(x_ref[...], w_ref[...], preferred_element_type=jnp.float32)
        + b_ref[...]
    ).astype(o_ref.dtype)


def _linear_acc_kernel(x_ref, w_ref, b_ref, o_ref, acc_ref):
    """Tiled-K path (only for very large hidden sizes)."""
    k = pl.program_id(2)

    @pl.when(k == 0)
    def _():
        acc_ref[...] = jnp.zeros_like(acc_ref)

    acc_ref[...] += jnp.dot(
        x_ref[...], w_ref[...], preferred_element_type=jnp.float32
    )

    @pl.when(k == pl.num_programs(2) - 1)
    def _():
        o_ref[...] = (acc_ref[...] + b_ref[...]).astype(o_ref.dtype)


def region_feature_regression(x, weight, bias, *, tm=None, tn=None, tk=None,
                              compute_dtype=None):
    """x: [B, S, hidden]; weight: [hidden, feat_dim]; bias: [feat_dim].

    Returns x @ weight + bias with shape [B, S, feat_dim].
    `compute_dtype=jnp.bfloat16` optionally casts x/weight (f32 accumulate kept).
    """
    B, S, H = x.shape
    Hw, F = weight.shape
    assert H == Hw, "hidden dim mismatch"

    M = B * S
    out_dtype = x.dtype
    x2d = x.reshape(M, H)

    if compute_dtype is not None:
        x2d = x2d.astype(compute_dtype)
        weight = weight.astype(compute_dtype)

    itemsize = jnp.dtype(x2d.dtype).itemsize
    out_itemsize = jnp.dtype(out_dtype).itemsize
    # Sublane packing granularity of the M axis: 8 rows f32, 16 bf16, 32 int8.
    m_align = max(8, 32 // itemsize)

    ws_budget, vmem_limit = _vmem_config()

    # ---- K (reduction) axis: hold the full hidden dim whenever reasonable ----
    if tk is None:
        tk = H if H <= 4096 else 2048
    single_k = tk >= H
    if single_k:
        tk = H

    # ---- N axis: keep the whole feature dim resident if the panel fits ------
    if tn is None:
        w_panel_budget = ws_budget // 3          # ~8 MiB v7x, ~16 MiB v5e/v6e
        if single_k and H * F * itemsize <= w_panel_budget:
            tn = F                               # one lane-dense output panel
        elif F <= 512:
            tn = F
        else:
            tn = 512                             # lane-dense, 256-aligned tile

    # ---- M axis: size from the double-buffered VMEM working-set budget ------
    if tm is None:
        w_db = 2 * tk * tn * itemsize                       # weight dbl-buffer
        per_row = 2 * tk * itemsize + 2 * tn * out_itemsize  # x + out dbl-buf
        if not single_k:
            per_row += tn * 4                               # f32 accumulator
        avail = max(ws_budget - w_db, ws_budget // 4)
        tm = max(m_align, min(512, _round_down(avail // per_row, m_align)))
        tm = min(tm, _round_up(M, m_align))                 # don't dwarf M
        if M > m_align and pl.cdiv(M, tm) < 2:
            # Feed both v7x TensorCores: guarantee >= 2 parallel M blocks.
            tm = max(m_align, _round_up(pl.cdiv(M, 2), m_align))
        if M <= m_align:
            tm = M                                          # full-dim block

    m_blocks = pl.cdiv(M, tm)
    n_blocks = pl.cdiv(F, tn)
    bias2d = bias.reshape(1, F).astype(jnp.float32)

    if single_k:
        # No padding of x / weight / out: ragged last M/N blocks read garbage
        # that only contributes to output rows/cols which are never written.
        n_outer = (n_blocks == 1) or (n_blocks * M <= m_blocks * F)
        if n_outer:
            # Weight/bias block constant across the inner M sweep -> resident.
            grid = (n_blocks, m_blocks)
            x_map = lambda j, i: (i, 0)
            w_map = lambda j, i: (0, j)
            b_map = lambda j, i: (0, j)
            o_map = lambda j, i: (i, j)
        else:
            # x is the larger operand: read it once, re-stream the weight.
            grid = (m_blocks, n_blocks)
            x_map = lambda i, j: (i, 0)
            w_map = lambda i, j: (0, j)
            b_map = lambda i, j: (0, j)
            o_map = lambda i, j: (i, j)

        out2d = pl.pallas_call(
            _linear_fused_kernel,
            out_shape=jax.ShapeDtypeStruct((M, F), out_dtype),
            grid_spec=pltpu.PrefetchScalarGridSpec(
                num_scalar_prefetch=0,
                grid=grid,
                in_specs=[
                    pl.BlockSpec((tm, H), x_map),    # x tile
                    pl.BlockSpec((H, tn), w_map),    # weight panel
                    pl.BlockSpec((1, tn), b_map),    # bias
                ],
                out_specs=pl.BlockSpec((tm, tn), o_map),
            ),
            compiler_params=pltpu.CompilerParams(
                dimension_semantics=("parallel", "parallel"),
                vmem_limit_bytes=vmem_limit,
            ),
        )(x2d, weight, bias2d)
    else:
        # Very large hidden size: tile K as the (last) reduction axis with a
        # resident f32 accumulator.  K is zero-padded so ragged-K garbage can
        # never contaminate real rows (rare path, H > 4096 only).
        K_pad = _round_up(H, tk)
        if K_pad != H:
            x2d = jnp.pad(x2d, ((0, 0), (0, K_pad - H)))
            weight = jnp.pad(weight, ((0, K_pad - H), (0, 0)))
        grid = (n_blocks, m_blocks, K_pad // tk)
        out2d = pl.pallas_call(
            _linear_acc_kernel,
            out_shape=jax.ShapeDtypeStruct((M, F), out_dtype),
            grid_spec=pltpu.PrefetchScalarGridSpec(
                num_scalar_prefetch=0,
                grid=grid,
                in_specs=[
                    pl.BlockSpec((tm, tk), lambda j, i, k: (i, k)),  # x tile
                    pl.BlockSpec((tk, tn), lambda j, i, k: (k, j)),  # weight
                    pl.BlockSpec((1, tn), lambda j, i, k: (0, j)),   # bias
                ],
                out_specs=pl.BlockSpec((tm, tn), lambda j, i, k: (i, j)),
                scratch_shapes=[pltpu.VMEM((tm, tn), jnp.float32)],
            ),
            compiler_params=pltpu.CompilerParams(
                dimension_semantics=("parallel", "parallel", "arbitrary"),
                vmem_limit_bytes=vmem_limit,
            ),
        )(x2d, weight, bias2d)

    return out2d.reshape(B, S, F)


if __name__ == "__main__":
    # Small, deterministic example shapes implied by the module:
    #   hidden_size=128, feat_dim=256, batch=2, seq=8
    hidden_size = 128
    feat_dim = 256
    batch, seq = 2, 8

    key = jax.random.PRNGKey(0)
    kx, kw = jax.random.split(key)

    x = jax.random.normal(kx, (batch, seq, hidden_size), dtype=jnp.float32)
    # img_linear_weight is stored as [hidden_size, feat_dim] so that after the
    # module's .t() inside F.linear the computation is x @ weight + bias.
    img_linear_weight = (
        jax.random.normal(kw, (hidden_size, feat_dim), dtype=jnp.float32) * 0.02
    )
    # bias initialized to zeros (matches nn.Parameter(torch.zeros(feat_dim)))
    bias = jnp.zeros((feat_dim,), dtype=jnp.float32)

    out = region_feature_regression(x, img_linear_weight, bias)
    out = jax.block_until_ready(out)

    # Reference check in plain JAX (F.linear(x, W.t(), b) == x @ W + b).
    ref = jnp.einsum("bsh,hf->bsf", x, img_linear_weight) + bias
    assert out.shape == (batch, seq, feat_dim)
    assert jnp.allclose(out, ref, atol=1e-4, rtol=1e-4)

    print("KERNEL_OK")
</pallas_src>

<mosaic_0001>
module attributes {stable_mosaic.version = 11 : i64} {
  func.func @_linear_fused_kernel(%arg0: i32, %arg1: i32, %arg2: memref<8x128xf32, #tpu.memory_space<vmem>>, %arg3: memref<128x256xf32, #tpu.memory_space<vmem>>, %arg4: memref<1x256xf32, #tpu.memory_space<vmem>>, %arg5: memref<8x256xf32, #tpu.memory_space<vmem>>) attributes {dimension_semantics = [#tpu.dimension_semantics<parallel>, #tpu.dimension_semantics<parallel>], iteration_bounds = array<i64: 1, 2>, scalar_prefetch = 0 : i64, scratch_operands = 0 : i64, tpu.core_type = #tpu.core_type<tc>, window_params = [{transform_indices = @transform_0, window_bounds = array<i64: 8, 128>}, {transform_indices = @transform_1, window_bounds = array<i64: 128, 256>}, {transform_indices = @transform_2, window_bounds = array<i64: 1, 256>}, {transform_indices = @transform_3, window_bounds = array<i64: 8, 256>}]} {
    %c0 = arith.constant 0 : index
    %c0_0 = arith.constant 0 : index
    %0 = vector.load %arg2[%c0, %c0_0] : memref<8x128xf32, #tpu.memory_space<vmem>>, vector<8x128xf32>
    %c0_1 = arith.constant 0 : index
    %c0_2 = arith.constant 0 : index
    %1 = vector.load %arg3[%c0_1, %c0_2] : memref<128x256xf32, #tpu.memory_space<vmem>>, vector<128x256xf32>
    %cst = arith.constant dense<0.000000e+00> : vector<8x256xf32>
    %2 = tpu.matmul %0, %1, %cst {dimension_numbers = #tpu.dot_dimension_numbers<[1], [0], [0], [1], [0, 0, 1, 1], [], []>} : vector<8x128xf32>, vector<128x256xf32>, vector<8x256xf32> -> vector<8x256xf32>
    %c0_3 = arith.constant 0 : index
    %c0_4 = arith.constant 0 : index
    %3 = vector.load %arg4[%c0_3, %c0_4] : memref<1x256xf32, #tpu.memory_space<vmem>>, vector<1x256xf32>
    %4 = vector.broadcast %3 : vector<1x256xf32> to vector<8x256xf32>
    %5 = arith.addf %2, %4 : vector<8x256xf32>
    %c0_5 = arith.constant 0 : index
    %c0_6 = arith.constant 0 : index
    %6 = vector.load %arg5[%c0_5, %c0_6] : memref<8x256xf32, #tpu.memory_space<vmem>>, vector<8x256xf32>
    tpu.vector_store %arg5[%c0_5, %c0_6], %5 {strides = array<i32>} : memref<8x256xf32, #tpu.memory_space<vmem>>, vector<8x256xf32>,
    return
  }
  func.func @transform_0(%arg0: i32, %arg1: i32) -> (i32, i32) {
    %c0_i32 = arith.constant 0 : i32
    %c0_i32_0 = arith.constant 0 : i32
    return %arg1, %c0_i32 : i32, i32
  }
  func.func @transform_1(%arg0: i32, %arg1: i32) -> (i32, i32) {
    %c0_i32 = arith.constant 0 : i32
    %c0_i32_0 = arith.constant 0 : i32
    return %c0_i32, %arg0 : i32, i32
  }
  func.func @transform_2(%arg0: i32, %arg1: i32) -> (i32, i32) {
    %c0_i32 = arith.constant 0 : i32
    %c0_i32_0 = arith.constant 0 : i32
    return %c0_i32, %arg0 : i32, i32
  }
  func.func @transform_3(%arg0: i32, %arg1: i32) -> (i32, i32) {
    %c0_i32 = arith.constant 0 : i32
    return %arg1, %arg0 : i32, i32
  }
}

</mosaic_0001>

<llo_original>
// kernel: tpu_custom_call.1
$region0: #{tpu_custom_call.1}
  #allocation0 [shape = 'u32[]', space=smem, size = 0x4, offset = 0x4, fixed_abs, tag = 'smem constant byte address 0x4 - core index']
  #allocation1 [shape = 'u32[72,128]{1,0:T(1,128)}', space=vmem, size = 0x9000, scoped, tag = 'internal scratch']
  %s0 = inlined_call_operand.hbm [shape: f32[16,128], index: 0, kind: input, shape index: {}]
  %s1 = inlined_call_operand.hbm [shape: f32[128,256], index: 1, kind: input, shape index: {}]
  %s2 = inlined_call_operand.hbm [shape: f32[1,256], index: 2, kind: input, shape index: {}]
  %s3 = inlined_call_operand.hbm [shape: f32[16,256], index: 3, kind: output, shape index: {}]
  %s4 = sld [smem:[#allocation0]]
  $region57: #{tpu_custom_call.1} parent=0
    _
  %s6 = ssub.s32 1, %s4
  %s7 = scalar_select 0, %s6, %s4
  $region1: #{tpu_custom_call.1} parent=0
    #allocation2 [shape = 'u8[8192]{0}', space=vmem, size = 0x2000, scoped, tag = 'input window, operand 0']
    #allocation3 [shape = 's32[2]{0}', space=sflag, size = 0x8, scoped, tag = 'scoped memory for tpu_custom_call.1']
    #allocation4 [shape = 's32[2]{0}', space=sflag, size = 0x8, scoped, tag = 'scoped memory for tpu_custom_call.1']
    #allocation5 [shape = 'u8[131072]{0}', space=vmem, size = 0x20000, scoped, tag = 'input window, operand 1, single buffered']
    #allocation6 [shape = 's32[1]{0}', space=sflag, size = 0x4, scoped, tag = 'scoped memory for tpu_custom_call.1']
    #allocation7 [shape = 'u8[1024]{0}', space=vmem, size = 0x400, scoped, tag = 'input window, operand 2, single buffered']
    #allocation8 [shape = 'u8[16384]{0}', space=vmem, size = 0x4000, scoped, tag = 'output window, operand 0']
    %8 = vsyncpa [#allocation3], 0
    %s9 = scalar_lea.sflag [#allocation3], 1
    %10 = vsyncpa %s9, 0
    %11 = vsyncpa [#allocation6], 0
    %12 = vsyncpa [#allocation4], 0
    %s13 = scalar_lea.sflag [#allocation4], 1
    %14 = vsyncpa %s13, 0
    loop: start=0, step=1, limit=4
    $region2: #{tpu_custom_call.1} parent=1 // loop_pre_header
      _
    $region3: #{tpu_custom_call.1} parent=1 // loop_header
      %s16 = sphi 0, %s20
      %p17 = scmp.ge.s32.totalorder %s16, 4
      %s23 = sphi 0, %s35
      %s24 = sphi 0, %s31
      %s25 = sphi 0, %s23
      %s26 = sphi 0, %s24
      %s27 = sphi 0, %s25
      %s28 = sphi 0, %s26
      %s38 = sphi 0, %s40
      %s41 = sphi 0, %s38
      %s42 = sphi 0, %s41
      %s58 = sphi 0, %s42
      %s64 = sphi 0, %s66
      %s67 = sphi 0, %s64
      %s68 = sphi 0, %s67
      %s84 = sphi 0, %s68
      %s90 = sphi 0, %s92
      %s93 = sphi 0, %s90
      %s94 = sphi 0, %s93
      %s110 = sphi 0, %s94
      %s118 = sphi 0, %s120
      %s121 = sphi 0, %s118
      %s122 = sphi 0, %s121
      %s138 = sphi 0, %s122
    $region4: #{tpu_custom_call.1} parent=1 // loop_header_branch
      %19 = sbr.rel (%p17) target = $region8
    $region5: #{tpu_custom_call.1} parent=1 // loop_body
      %s21 = ssub.s32 %s16, 1
      %s22 = ssub.s32 %s16, 2
      %s29 = sadd.s32 1, %s24
      %p30 = scmp.ge.s32.totalorder %s29, 2
      %s31 = scalar_select %p30, 0, %s29
      %s32 = sadd.s32 1, %s23
      %s33 = scalar_select %p30, %s32, %s23
      %p34 = scmp.ge.s32.totalorder %s33, 1
      %s35 = scalar_select %p34, 0, %s33
      %s36 = ssub.s32 %s24, %s31
      %p37 = scmp.eq.s32.totalorder %s36, 0
      %s39 = sadd.s32 %s38, 1
      %s40 = scalar_select %p37, %s38, %s39
      %p43 = pneg %p37
      %p44 = scmp.eq.s32.totalorder %s16, 1
      %p45 = por %p43, %p44
      %p46 = scmp.ne.s32.totalorder %s38, %s41
      %p47 = scmp.eq.s32.totalorder %s16, 0
      %p48 = por %p46, %p47
      %p49 = scmp.ne.s32.totalorder %s38, %s41
      %p50 = scmp.eq.s32.totalorder %s21, 1
      %p51 = por %p49, %p50
      %p52 = scmp.ne.s32.totalorder %s41, %s42
      %p53 = scmp.eq.s32.totalorder %s21, 0
      %p54 = por %p52, %p53
      %p55 = scmp.ne.s32.totalorder %s41, %s42
      %p56 = scmp.eq.s32.totalorder %s22, 1
      %p57 = por %p55, %p56
      %p59 = scmp.ne.s32.totalorder %s42, %s58
      %p60 = scmp.eq.s32.totalorder %s22, 0
      %p61 = por %p59, %p60
      %s62 = ssub.s32 %s23, %s35
      %p63 = scmp.eq.s32.totalorder %s62, 0
      %s65 = sadd.s32 %s64, 1
      %s66 = scalar_select %p63, %s64, %s65
      %p69 = pneg %p63
      %p70 = scmp.eq.s32.totalorder %s16, 1
      %p71 = por %p69, %p70
      %p72 = scmp.ne.s32.totalorder %s64, %s67
      %p73 = scmp.eq.s32.totalorder %s16, 0
      %p74 = por %p72, %p73
      %p75 = scmp.ne.s32.totalorder %s64, %s67
      %p76 = scmp.eq.s32.totalorder %s21, 1
      %p77 = por %p75, %p76
      %p78 = scmp.ne.s32.totalorder %s67, %s68
      %p79 = scmp.eq.s32.totalorder %s21, 0
      %p80 = por %p78, %p79
      %p81 = scmp.ne.s32.totalorder %s67, %s68
      %p82 = scmp.eq.s32.totalorder %s22, 1
      %p83 = por %p81, %p82
      %p85 = scmp.ne.s32.totalorder %s68, %s84
      %p86 = scmp.eq.s32.totalorder %s22, 0
      %p87 = por %p85, %p86
      %s88 = ssub.s32 %s23, %s35
      %p89 = scmp.eq.s32.totalorder %s88, 0
      %s91 = sadd.s32 %s90, 1
      %s92 = scalar_select %p89, %s90, %s91
      %p95 = pneg %p89
      %p96 = scmp.eq.s32.totalorder %s16, 1
      %p97 = por %p95, %p96
      %p98 = scmp.ne.s32.totalorder %s90, %s93
      %p99 = scmp.eq.s32.totalorder %s16, 0
      %p100 = por %p98, %p99
      %p101 = scmp.ne.s32.totalorder %s90, %s93
      %p102 = scmp.eq.s32.totalorder %s21, 1
      %p103 = por %p101, %p102
      %p104 = scmp.ne.s32.totalorder %s93, %s94
      %p105 = scmp.eq.s32.totalorder %s21, 0
      %p106 = por %p104, %p105
      %p107 = scmp.ne.s32.totalorder %s93, %s94
      %p108 = scmp.eq.s32.totalorder %s22, 1
      %p109 = por %p107, %p108
      %p111 = scmp.ne.s32.totalorder %s94, %s110
      %p112 = scmp.eq.s32.totalorder %s22, 0
      %p113 = por %p111, %p112
      %s114 = ssub.s32 %s24, %s31
      %s115 = ssub.s32 %s23, %s35
      %s116 = sor.u32 %s114, %s115
      %p117 = scmp.eq.s32.totalorder %s116, 0
      %s119 = sadd.s32 %s118, 1
      %s120 = scalar_select %p117, %s118, %s119
      %p123 = pneg %p117
      %p124 = scmp.eq.s32.totalorder %s16, 1
      %p125 = por %p123, %p124
      %p126 = scmp.ne.s32.totalorder %s118, %s121
      %p127 = scmp.eq.s32.totalorder %s16, 0
      %p128 = por %p126, %p127
      %p129 = scmp.ne.s32.totalorder %s118, %s121
      %p130 = scmp.eq.s32.totalorder %s21, 1
      %p131 = por %p129, %p130
      %p132 = scmp.ne.s32.totalorder %s121, %s122
      %p133 = scmp.eq.s32.totalorder %s21, 0
      %p134 = por %p132, %p133
      %p135 = scmp.ne.s32.totalorder %s121, %s122
      %p136 = scmp.eq.s32.totalorder %s22, 1
      %p137 = por %p135, %p136
      %p139 = scmp.ne.s32.totalorder %s122, %s138
      %p140 = scmp.eq.s32.totalorder %s22, 0
      %p141 = por %p139, %p140
      %p142 = scmp.le.s32.totalorder 1, %s16
      %p143 = scmp.lt.s32.totalorder %s16, 3
      %p144 = pnand %p142, %p143
      %p145 = pneg %p144
      // Predicated region
      $region9: #{tpu_custom_call.1} parent=5 // pred_check
        _
      $region10: #{tpu_custom_call.1} parent=5 // pred_check_branch
        %147 = sbr.rel (%p144) target = $region12
      $region11: #{tpu_custom_call.1} parent=5 // pred_region
        %s148 = ssub.s32 %s16, 1
        // Predicated region
        $region13: #{tpu_custom_call.1} parent=11 // pred_check
          %p149 = pneg %p80
        $region14: #{tpu_custom_call.1} parent=11 // pred_check_branch
          %151 = sbr.rel (%p149) target = $region16
        $region15: #{tpu_custom_call.1} parent=11 // pred_region
          %s152 = smul.u32 2, %s25
          %154 = vsyncadd [#allocation6], 0
          %s155 = smul.addr %s152, 8
          %s156 = scalar_lea.hbm %s1, %s155
          %s157 = sshll.u32 %s156, 4
          %s158 = int_to_ptr.hbm [resolvable:$true] %s157
          %s159 = sshll.u32 [#allocation5], 4
          %s160 = int_to_ptr.vmem [resolvable:$true] %s159
          %165 = dma.hbm_to_vmem [thread:$0]  %s158, 4096, %s160, [#allocation6], 256, 256, 16
        $region16: #{tpu_custom_call.1} parent=11 // pred_fallthru
          _
        // Predicated region
        $region17: #{tpu_custom_call.1} parent=11 // pred_check
          %p166 = pneg %p106
        $region18: #{tpu_custom_call.1} parent=11 // pred_check_branch
          %168 = sbr.rel (%p166) target = $region20
        $region19: #{tpu_custom_call.1} parent=11 // pred_region
          %s169 = smul.u32 2, %s25
          %171 = vsyncadd [#allocation6], 0
          %s172 = scalar_lea.hbm %s2, %s169
          %s174 = sshll.u32 %s172, 4
          %s175 = int_to_ptr.hbm [resolvable:$true] %s174
          %s176 = sshll.u32 [#allocation7], 4
          %s177 = int_to_ptr.vmem [resolvable:$true] %s176
          %179 = dma.hbm_to_vmem [thread:$0]  %s175, 32, %s177, [#allocation6]
        $region20: #{tpu_custom_call.1} parent=11 // pred_fallthru
          _
      $region12: #{tpu_custom_call.1} parent=5 // pred_fallthru
        _
      %p180 = scmp.lt.s32.totalorder %s16, 2
      // Predicated region
      $region21: #{tpu_custom_call.1} parent=5 // pred_check
        %p181 = pneg %p180
      $region22: #{tpu_custom_call.1} parent=5 // pred_check_branch
        %183 = sbr.rel (%p181) target = $region24
      $region23: #{tpu_custom_call.1} parent=5 // pred_region
        // Predicated region
        $region25: #{tpu_custom_call.1} parent=23 // pred_check
          %p184 = pneg %p48
        $region26: #{tpu_custom_call.1} parent=23 // pred_check_branch
          %186 = sbr.rel (%p184) target = $region28
        $region27: #{tpu_custom_call.1} parent=23 // pred_region
          %s187 = sand.u32 %s38, 1
          %s188 = scalar_lea.sflag [#allocation3], %s187
          %s189 = sand.u32 %s38, 1
          %s190 = smul.addr %s189, 8
          %s191 = scalar_lea.vmem [#allocation2], %s190
          %193 = vsyncadd %s188, 0
          %s194 = smul.addr %s24, 8
          %s195 = scalar_lea.hbm %s0, %s194
          %s197 = sshll.u32 %s195, 4
          %s198 = int_to_ptr.hbm [resolvable:$true] %s197
          %s199 = sshll.u32 %s191, 4
          %s200 = int_to_ptr.vmem [resolvable:$true] %s199
          %202 = dma.hbm_to_vmem [thread:$0]  %s198, 128, %s200, %s188
        $region28: #{tpu_custom_call.1} parent=23 // pred_fallthru
          _
      $region24: #{tpu_custom_call.1} parent=5 // pred_fallthru
        _
      %p203 = scmp.le.s32.totalorder 1, %s16
      %p204 = scmp.lt.s32.totalorder %s16, 3
      %p205 = pnand %p203, %p204
      %p206 = pneg %p205
      // Predicated region
      $region29: #{tpu_custom_call.1} parent=5 // pred_check
        _
      $region30: #{tpu_custom_call.1} parent=5 // pred_check_branch
        %208 = sbr.rel (%p205) target = $region32
      $region31: #{tpu_custom_call.1} parent=5 // pred_region
        %s209 = ssub.s32 %s16, 1
        %s210 = sand.u32 %s41, 1
        %s211 = scalar_lea.sflag [#allocation3], %s210
        %s212 = sand.u32 %s41, 1
        %s213 = smul.addr %s212, 8
        %s214 = scalar_lea.vmem [#allocation2], %s213
        // Predicated region
        $region33: #{tpu_custom_call.1} parent=31 // pred_check
          %p215 = pneg %p54
        $region34: #{tpu_custom_call.1} parent=31 // pred_check_branch
          %217 = sbr.rel (%p215) target = $region36
        $region35: #{tpu_custom_call.1} parent=31 // pred_region
          %219 = dma.done %s211, 128
        $region36: #{tpu_custom_call.1} parent=31 // pred_fallthru
          _
        // Predicated region
        $region37: #{tpu_custom_call.1} parent=31 // pred_check
          %p220 = pneg %p80
        $region38: #{tpu_custom_call.1} parent=31 // pred_check_branch
          %222 = sbr.rel (%p220) target = $region40
        $region39: #{tpu_custom_call.1} parent=31 // pred_region
          %224 = dma.done [#allocation6], 4096
        $region40: #{tpu_custom_call.1} parent=31 // pred_fallthru
          _
        // Predicated region
        $region41: #{tpu_custom_call.1} parent=31 // pred_check
          %p225 = pneg %p106
        $region42: #{tpu_custom_call.1} parent=31 // pred_check_branch
          %227 = sbr.rel (%p225) target = $region44
        $region43: #{tpu_custom_call.1} parent=31 // pred_region
          %229 = dma.done [#allocation6], 32
        $region44: #{tpu_custom_call.1} parent=31 // pred_fallthru
          _
        %s230 = sand.u32 %s41, 1
        %s231 = scalar_lea.sflag [#allocation3], %s230
        %s232 = sand.u32 %s41, 1
        %s233 = smul.addr %s232, 8
        %s234 = scalar_lea.vmem [#allocation2], %s233
        %p235 = pneg %p54
        %p236 = pneg %p51
        %p237 = pneg %p80
        %p238 = pneg %p77
        %p239 = pneg %p106
        %p240 = pneg %p103
        %p241 = pneg %p134
        %p242 = pneg %p131
        %s243 = sand.u32 %s121, 1
        %s244 = scalar_lea.sflag [#allocation4], %s243
        %s245 = sand.u32 %s121, 1
        %s246 = smul.addr %s245, 16
        %s247 = scalar_lea.vmem [#allocation8], %s246
        %s248 = smul.u32 2, %s25
        %s249 = smul.u32 2, %s25
        %s250 = smul.u32 2, %s25
        %v251 = vld [vmem:[%s214] sm:$0xff]
        %v252 = vld [vmem:[#allocation5] sm:$0xff]
        %v253 = vld [vmem:[#allocation5 + $0x8] sm:$0xff]
        %v254 = vld [vmem:[#allocation5 + $0x10] sm:$0xff]
        %v255 = vld [vmem:[#allocation5 + $0x18] sm:$0xff]
        %v256 = vld [vmem:[#allocation5 + $0x20] sm:$0xff]
        %v257 = vld [vmem:[#allocation5 + $0x28] sm:$0xff]
        %v258 = vld [vmem:[#allocation5 + $0x30] sm:$0xff]
        %v259 = vld [vmem:[#allocation5 + $0x38] sm:$0xff]
        %v260 = vld [vmem:[#allocation5 + $0x40] sm:$0xff]
        %v261 = vld [vmem:[#allocation5 + $0x48] sm:$0xff]
        %v262 = vld [vmem:[#allocation5 + $0x50] sm:$0xff]
        %v263 = vld [vmem:[#allocation5 + $0x58] sm:$0xff]
        %v264 = vld [vmem:[#allocation5 + $0x60] sm:$0xff]
        %v265 = vld [vmem:[#allocation5 + $0x68] sm:$0xff]
        %v266 = vld [vmem:[#allocation5 + $0x70] sm:$0xff]
        %v267 = vld [vmem:[#allocation5 + $0x78] sm:$0xff]
        %v268 = vld [vmem:[#allocation5 + $0x80] sm:$0xff]
        %v269 = vld [vmem:[#allocation5 + $0x88] sm:$0xff]
        %v270 = vld [vmem:[#allocation5 + $0x90] sm:$0xff]
        %v271 = vld [vmem:[#allocation5 + $0x98] sm:$0xff]
        %v272 = vld [vmem:[#allocation5 + $0xa0] sm:$0xff]
        %v273 = vld [vmem:[#allocation5 + $0xa8] sm:$0xff]
        %v274 = vld [vmem:[#allocation5 + $0xb0] sm:$0xff]
        %v275 = vld [vmem:[#allocation5 + $0xb8] sm:$0xff]
        %v276 = vld [vmem:[#allocation5 + $0xc0] sm:$0xff]
        %v277 = vld [vmem:[#allocation5 + $0xc8] sm:$0xff]
        %v278 = vld [vmem:[#allocation5 + $0xd0] sm:$0xff]
        %v279 = vld [vmem:[#allocation5 + $0xd8] sm:$0xff]
        %v280 = vld [vmem:[#allocation5 + $0xe0] sm:$0xff]
        %v281 = vld [vmem:[#allocation5 + $0xe8] sm:$0xff]
        %v282 = vld [vmem:[#allocation5 + $0xf0] sm:$0xff]
        %v283 = vld [vmem:[#allocation5 + $0xf8] sm:$0xff]
        %v284 = vld [vmem:[#allocation7] sm:$0x3]
        %v286 = vperm.slane %v284, 0
        %v287 = vperm.slane %v284, 1
        %290 = vmatpush.msra.mxu0 %v282
        %291 = vmatpush.msra.mxu0 %v280
        %292 = vmatpush.msra.mxu0 %v278
        %293 = vmatpush.msra.mxu0 %v276
        %294 = vmatpush.msra.mxu0 %v274
        %295 = vmatpush.msra.mxu0 %v272
        %296 = vmatpush.msra.mxu0 %v270
        %297 = vmatpush.msra.mxu0 %v268
        %298 = vmatpush.msra.mxu0 %v266
        %299 = vmatpush.msra.mxu0 %v264
        %300 = vmatpush.msra.mxu0 %v262
        %301 = vmatpush.msra.mxu0 %v260
        %302 = vmatpush.msra.mxu0 %v258
        %303 = vmatpush.msra.mxu0 %v256
        %304 = vmatpush.msra.mxu0 %v254
        %305 = vmatpush.msra.mxu0 %v252
        %306 = vmatmul.f32.gmra.mxu0 %v251
        %v307 = vpop.f32.mrf.mxu0
        %v308 = vadd.f32 %v286, %v307
        %309 = vdwg.mxu0
        %310 = vmatpush.msra.mxu0 %v283
        %311 = vmatpush.msra.mxu0 %v281
        %312 = vmatpush.msra.mxu0 %v279
        %313 = vmatpush.msra.mxu0 %v277
        %314 = vmatpush.msra.mxu0 %v275
        %315 = vmatpush.msra.mxu0 %v273
        %316 = vmatpush.msra.mxu0 %v271
        %317 = vmatpush.msra.mxu0 %v269
        %318 = vmatpush.msra.mxu0 %v267
        %319 = vmatpush.msra.mxu0 %v265
        %320 = vmatpush.msra.mxu0 %v263
        %321 = vmatpush.msra.mxu0 %v261
        %322 = vmatpush.msra.mxu0 %v259
        %323 = vmatpush.msra.mxu0 %v257
        %324 = vmatpush.msra.mxu0 %v255
        %325 = vmatpush.msra.mxu0 %v253
        %326 = vmatmul.f32.gmra.mxu0 %v251
        %v327 = vpop.f32.mrf.mxu0
        %v328 = vadd.f32 %v287, %v327
        %329 = vdwg.mxu0
        %330 = vst [vmem:[%s247] sm:$0xff] %v308
        %331 = vst [vmem:[%s247 + $0x8] sm:$0xff] %v328
        %s332 = sand.u32 %s121, 1
        %s333 = scalar_lea.sflag [#allocation4], %s332
        %s334 = sand.u32 %s121, 1
        %s335 = smul.addr %s334, 16
        %s336 = scalar_lea.vmem [#allocation8], %s335
        // Predicated region
        $region45: #{tpu_custom_call.1} parent=31 // pred_check
          %p337 = pneg %p131
        $region46: #{tpu_custom_call.1} parent=31 // pred_check_branch
          %339 = sbr.rel (%p337) target = $region48
        $region47: #{tpu_custom_call.1} parent=31 // pred_region
          %s340 = smul.u32 2, %s25
          %342 = vsyncadd %s333, 0
          %s343 = smul.addr %s26, 2
          %s344 = sadd.s32 %s340, %s343
          %s345 = smul.addr %s344, 8
          %s346 = scalar_lea.hbm %s3, %s345
          %s348 = sshll.u32 %s336, 4
          %s349 = int_to_ptr.vmem [resolvable:$true] %s348
          %s350 = sshll.u32 %s346, 4
          %s351 = int_to_ptr.hbm [resolvable:$true] %s350
          %353 = dma.vmem_to_hbm [thread:$0]  %s349, 256, %s351, %s333
        $region48: #{tpu_custom_call.1} parent=31 // pred_fallthru
          _
      $region32: #{tpu_custom_call.1} parent=5 // pred_fallthru
        _
      %p354 = scmp.le.s32.totalorder 2, %s16
      // Predicated region
      $region49: #{tpu_custom_call.1} parent=5 // pred_check
        %p355 = pneg %p354
      $region50: #{tpu_custom_call.1} parent=5 // pred_check_branch
        %357 = sbr.rel (%p355) target = $region52
      $region51: #{tpu_custom_call.1} parent=5 // pred_region
        %s358 = ssub.s32 %s16, 2
        // Predicated region
        $region53: #{tpu_custom_call.1} parent=51 // pred_check
          %p359 = pneg %p137
        $region54: #{tpu_custom_call.1} parent=51 // pred_check_branch
          %361 = sbr.rel (%p359) target = $region56
        $region55: #{tpu_custom_call.1} parent=51 // pred_region
          %s362 = sand.u32 %s122, 1
          %s363 = scalar_lea.sflag [#allocation4], %s362
          %s364 = sand.u32 %s122, 1
          %s365 = smul.addr %s364, 16
          %s366 = scalar_lea.vmem [#allocation8], %s365
          %368 = dma.done %s363, 256
        $region56: #{tpu_custom_call.1} parent=51 // pred_fallthru
          _
      $region52: #{tpu_custom_call.1} parent=5 // pred_fallthru
        _
    $region6: #{tpu_custom_call.1} parent=1 // loop_footer
      %s20 = sadd.s32 1, %s16
    $region7: #{tpu_custom_call.1} parent=1 // loop_footer_branch
      %15 = sbr.rel target = $region3
    $region8: #{tpu_custom_call.1} parent=1 // loop_exit
      _
    %369 = vsyncpa [#allocation3], 1
    %s370 = scalar_lea.sflag [#allocation3], 1
    %371 = vsyncpa %s370, 1
    %372 = vsyncpa [#allocation6], 1
    %373 = vsyncpa [#allocation4], 1
    %s374 = scalar_lea.sflag [#allocation4], 1
    %375 = vsyncpa %s374, 1

</llo_original>
